<compile_context>
chip_gen: v7x
topology: tpu7x:2x2x1
jax: 0.10.0
libtpu: 0.0.40
codegen_flags: <defaults>
</compile_context>

<pallas_src>
import functools

import jax
import jax.numpy as jnp
from jax.experimental import pallas as pl
from jax.experimental.pallas import tpu as pltpu


def _round_up(n, m):
    return ((n + m - 1) // m) * m


# ---------------------------------------------------------------------------
# Kernels
# ---------------------------------------------------------------------------
def cnf_field_kernel(x_ref, w1_ref, tb1_ref, w2_ref, b2_ref, out_ref):
    """dx = tanh(x @ W1 + (t*w1t + b1)) @ W2 + b2  for one batch tile.

    W1/W2 are bf16 (MXU), accumulation and elementwise math are f32.
    tb1 = t * w1t + b1 is precomputed on the host (t is constant per call).
    """
    x = x_ref[...]                                            # [TB, Dp] f32
    h = jnp.dot(x.astype(jnp.bfloat16), w1_ref[...],
                preferred_element_type=jnp.float32)           # [TB, Hp] f32
    h = jnp.tanh(h + tb1_ref[...])                            # f32 tanh (EUP)
    dx = jnp.dot(h.astype(jnp.bfloat16), w2_ref[...],
                 preferred_element_type=jnp.float32)          # [TB, Dp] f32
    out_ref[...] = (dx + b2_ref[...]).astype(out_ref.dtype)


def cnf_euler_kernel(x_ref, w1_ref, w1t_ref, b1_ref, w2_ref, b2_ref,
                     z_ref, state, *, t0, dt):
    """Fused fixed-step Euler integration of the CNF field.

    grid = (batch_tiles, num_steps); the state lives in a VMEM scratch that
    persists across the (inner, "arbitrary") step axis.  x is DMA'd in only
    once per batch tile; z is written back only at the last step.
    """
    step = pl.program_id(1)

    @pl.when(step == 0)
    def _():
        state[...] = x_ref[...]

    t = jnp.float32(t0) + step.astype(jnp.float32) * jnp.float32(dt)

    xs = state[...]                                           # [TB, Dp] f32
    h = jnp.dot(xs.astype(jnp.bfloat16), w1_ref[...],
                preferred_element_type=jnp.float32)
    h = jnp.tanh(h + t * w1t_ref[...] + b1_ref[...])          # f32 elementwise
    dx = jnp.dot(h.astype(jnp.bfloat16), w2_ref[...],
                 preferred_element_type=jnp.float32)
    dx = dx + b2_ref[...]

    state[...] = xs + jnp.float32(dt) * dx                    # Euler update

    @pl.when(step == pl.num_programs(1) - 1)
    def _():
        z_ref[...] = state[...]


# ---------------------------------------------------------------------------
# Wrappers
# ---------------------------------------------------------------------------
def _batch_tiling(B, block_b):
    tb = min(block_b, _round_up(B, 16))
    bp = _round_up(B, tb)
    return tb, bp, bp // tb


def cnf_forward(t, x, pparams, *, block_b=256):
    """CNF.forward(t, x) -> dx, single Pallas call over a batch grid."""
    w1, w1t, b1, w2, b2 = pparams
    B, D = x.shape
    Dp, Hp = w1.shape
    TB, Bp, nb = _batch_tiling(B, block_b)

    x_pad = jnp.zeros((Bp, Dp), jnp.float32).at[:B, :D].set(x)
    tb1 = jnp.asarray(t, jnp.float32) * w1t + b1              # hoisted [1, Hp]

    dx_pad = pl.pallas_call(
        cnf_field_kernel,
        out_shape=jax.ShapeDtypeStruct((Bp, Dp), jnp.float32),
        grid_spec=pltpu.PrefetchScalarGridSpec(
            num_scalar_prefetch=0,
            grid=(nb,),
            in_specs=[
                pl.BlockSpec((TB, Dp), lambda i: (i, 0)),     # x tile
                pl.BlockSpec((Dp, Hp), lambda i: (0, 0)),     # W1 (resident)
                pl.BlockSpec((1, Hp), lambda i: (0, 0)),      # t*w1t+b1
                pl.BlockSpec((Hp, Dp), lambda i: (0, 0)),     # W2 (resident)
                pl.BlockSpec((1, Dp), lambda i: (0, 0)),      # b2
            ],
            out_specs=pl.BlockSpec((TB, Dp), lambda i: (i, 0)),
        ),
        compiler_params=pltpu.CompilerParams(
            dimension_semantics=("parallel",)),
    )(x_pad, w1, tb1, w2, b2)
    return dx_pad[:B, :D]


def cnf_encode(x, pparams, *, t0=0.0, t1=1.0, num_steps=8, block_b=256):
    """CNF.encode hot path: fixed-step Euler odeint fused into one kernel."""
    w1, w1t, b1, w2, b2 = pparams
    B, D = x.shape
    Dp, Hp = w1.shape
    TB, Bp, nb = _batch_tiling(B, block_b)
    dt = (float(t1) - float(t0)) / float(num_steps)

    x_pad = jnp.zeros((Bp, Dp), jnp.float32).at[:B, :D].set(x)

    kernel = functools.partial(cnf_euler_kernel, t0=float(t0), dt=dt)

    z_pad = pl.pallas_call(
        kernel,
        out_shape=jax.ShapeDtypeStruct((Bp, Dp), jnp.float32),
        grid_spec=pltpu.PrefetchScalarGridSpec(
            num_scalar_prefetch=0,
            grid=(nb, num_steps),                             # steps innermost
            in_specs=[
                pl.BlockSpec((TB, Dp), lambda i, s: (i, 0)),  # x (fetched once/tile)
                pl.BlockSpec((Dp, Hp), lambda i, s: (0, 0)),  # W1 (resident)
                pl.BlockSpec((1, Hp), lambda i, s: (0, 0)),   # w1t
                pl.BlockSpec((1, Hp), lambda i, s: (0, 0)),   # b1
                pl.BlockSpec((Hp, Dp), lambda i, s: (0, 0)),  # W2 (resident)
                pl.BlockSpec((1, Dp), lambda i, s: (0, 0)),   # b2
            ],
            out_specs=pl.BlockSpec((TB, Dp), lambda i, s: (i, 0)),
            scratch_shapes=[pltpu.VMEM((TB, Dp), jnp.float32)],  # carried state
        ),
        compiler_params=pltpu.CompilerParams(
            dimension_semantics=("parallel", "arbitrary")),
    )(x_pad, w1, w1t, b1, w2, b2)
    return z_pad[:B, :D]


# ---------------------------------------------------------------------------
# Parameters
# ---------------------------------------------------------------------------
def init_params(key, dim, hidden):
    """Logical (unpadded) f32 params of the 2-layer time-conditioned MLP."""
    k1, k2, k3, _ = jax.random.split(key, 4)
    s1 = 1.0 / jnp.sqrt(dim + 1.0)
    s2 = 1.0 / jnp.sqrt(float(hidden))
    w1x = jax.random.uniform(k1, (dim, hidden), jnp.float32, -s1, s1)
    w1t = jax.random.uniform(k2, (1, hidden), jnp.float32, -s1, s1)
    b1 = jnp.zeros((1, hidden), jnp.float32)
    w2 = jax.random.uniform(k3, (hidden, dim), jnp.float32, -s2, s2)
    b2 = jnp.zeros((1, dim), jnp.float32)
    return w1x, w1t, b1, w2, b2


def prepare_params(params):
    """Zero-pad params to lane-dense (128-multiple) shapes; matmul weights bf16."""
    w1x, w1t, b1, w2, b2 = params
    D, H = w1x.shape
    Dp, Hp = _round_up(D, 128), _round_up(H, 128)
    w1p = jnp.zeros((Dp, Hp), jnp.float32).at[:D, :H].set(w1x).astype(jnp.bfloat16)
    w1tp = jnp.zeros((1, Hp), jnp.float32).at[:, :H].set(w1t)
    b1p = jnp.zeros((1, Hp), jnp.float32).at[:, :H].set(b1)
    w2p = jnp.zeros((Hp, Dp), jnp.float32).at[:H, :D].set(w2).astype(jnp.bfloat16)
    b2p = jnp.zeros((1, Dp), jnp.float32).at[:, :D].set(b2)
    return w1p, w1tp, b1p, w2p, b2p


# ---------------------------------------------------------------------------
# Pure-JAX references (mirror the bf16 matmul / f32 elementwise recipe)
# ---------------------------------------------------------------------------
def cnf_field_ref(t, x, params):
    w1x, w1t, b1, w2, b2 = params
    h = jnp.dot(x.astype(jnp.bfloat16), w1x.astype(jnp.bfloat16),
                preferred_element_type=jnp.float32)
    h = jnp.tanh(h + jnp.float32(t) * w1t + b1)
    dx = jnp.dot(h.astype(jnp.bfloat16), w2.astype(jnp.bfloat16),
                 preferred_element_type=jnp.float32)
    return dx + b2


def cnf_encode_ref(x, params, t0=0.0, t1=1.0, num_steps=8):
    dt = (t1 - t0) / num_steps
    z = x
    for s in range(num_steps):
        t = t0 + s * dt
        z = z + dt * cnf_field_ref(t, z, params)
    return z


if __name__ == "__main__":
    key = jax.random.PRNGKey(0)
    kx, kp = jax.random.split(key)

    B, D, H = 32, 16, 32          # small logical shapes (CNF state x: [B, D])
    NUM_STEPS = 8
    x = jax.random.normal(kx, (B, D), dtype=jnp.float32)
    params = init_params(kp, D, H)
    pparams = prepare_params(params)

    # --- single field evaluation: CNF.forward(t, x) -> dx -------------------
    t = 0.5
    dx = cnf_forward(t, x, pparams, block_b=16)   # block_b=16 -> 2 batch tiles
    jax.block_until_ready(dx)
    dx_ref = cnf_field_ref(t, x, params)
    assert dx.shape == (B, D) and dx.dtype == jnp.float32
    assert jnp.allclose(dx, dx_ref, atol=2e-2, rtol=2e-2), "forward mismatch"

    # --- fused Euler integration (CNF.encode hot path), one pallas_call -----
    z = cnf_encode(x, pparams, t0=0.0, t1=1.0, num_steps=NUM_STEPS, block_b=16)
    jax.block_until_ready(z)
    z_ref = cnf_encode_ref(x, params, 0.0, 1.0, NUM_STEPS)
    assert z.shape == (B, D) and z.dtype == jnp.float32
    assert jnp.allclose(z, z_ref, atol=2e-2, rtol=2e-2), "encode mismatch"

    print("KERNEL_OK")
</pallas_src>

<mosaic_0001>
module attributes {stable_mosaic.version = 11 : i64} {
  func.func @cnf_field_kernel(%arg0: i32, %arg1: memref<16x128xf32, #tpu.memory_space<vmem>>, %arg2: memref<128x128xbf16, #tpu.memory_space<vmem>>, %arg3: memref<1x128xf32, #tpu.memory_space<vmem>>, %arg4: memref<128x128xbf16, #tpu.memory_space<vmem>>, %arg5: memref<1x128xf32, #tpu.memory_space<vmem>>, %arg6: memref<16x128xf32, #tpu.memory_space<vmem>>) attributes {dimension_semantics = [#tpu.dimension_semantics<parallel>], iteration_bounds = array<i64: 2>, scalar_prefetch = 0 : i64, scratch_operands = 0 : i64, tpu.core_type = #tpu.core_type<tc>, window_params = [{transform_indices = @transform_0, window_bounds = array<i64: 16, 128>}, {pipeline_mode = #tpu.pipeline_mode<synchronous>, transform_indices = @transform_1, window_bounds = array<i64: 128, 128>}, {pipeline_mode = #tpu.pipeline_mode<synchronous>, transform_indices = @transform_2, window_bounds = array<i64: 1, 128>}, {pipeline_mode = #tpu.pipeline_mode<synchronous>, transform_indices = @transform_3, window_bounds = array<i64: 128, 128>}, {pipeline_mode = #tpu.pipeline_mode<synchronous>, transform_indices = @transform_4, window_bounds = array<i64: 1, 128>}, {transform_indices = @transform_5, window_bounds = array<i64: 16, 128>}]} {
    %c0 = arith.constant 0 : index
    %c0_0 = arith.constant 0 : index
    %0 = vector.load %arg1[%c0, %c0_0] : memref<16x128xf32, #tpu.memory_space<vmem>>, vector<16x128xf32>
    %1 = arith.truncf %0 : vector<16x128xf32> to vector<16x128xbf16>
    %c0_1 = arith.constant 0 : index
    %c0_2 = arith.constant 0 : index
    %2 = vector.load %arg2[%c0_1, %c0_2] : memref<128x128xbf16, #tpu.memory_space<vmem>>, vector<128x128xbf16>
    %cst = arith.constant dense<0.000000e+00> : vector<16x128xf32>
    %3 = tpu.matmul %1, %2, %cst {dimension_numbers = #tpu.dot_dimension_numbers<[1], [0], [0], [1], [0, 0, 1, 1], [], []>} : vector<16x128xbf16>, vector<128x128xbf16>, vector<16x128xf32> -> vector<16x128xf32>
    %c0_3 = arith.constant 0 : index
    %c0_4 = arith.constant 0 : index
    %4 = vector.load %arg3[%c0_3, %c0_4] : memref<1x128xf32, #tpu.memory_space<vmem>>, vector<1x128xf32>
    %5 = vector.broadcast %4 : vector<1x128xf32> to vector<16x128xf32>
    %6 = arith.addf %3, %5 : vector<16x128xf32>
    %7 = math.tanh %6 : vector<16x128xf32>
    %8 = arith.truncf %7 : vector<16x128xf32> to vector<16x128xbf16>
    %c0_5 = arith.constant 0 : index
    %c0_6 = arith.constant 0 : index
    %9 = vector.load %arg4[%c0_5, %c0_6] : memref<128x128xbf16, #tpu.memory_space<vmem>>, vector<128x128xbf16>
    %cst_7 = arith.constant dense<0.000000e+00> : vector<16x128xf32>
    %10 = tpu.matmul %8, %9, %cst_7 {dimension_numbers = #tpu.dot_dimension_numbers<[1], [0], [0], [1], [0, 0, 1, 1], [], []>} : vector<16x128xbf16>, vector<128x128xbf16>, vector<16x128xf32> -> vector<16x128xf32>
    %c0_8 = arith.constant 0 : index
    %c0_9 = arith.constant 0 : index
    %11 = vector.load %arg5[%c0_8, %c0_9] : memref<1x128xf32, #tpu.memory_space<vmem>>, vector<1x128xf32>
    %12 = vector.broadcast %11 : vector<1x128xf32> to vector<16x128xf32>
    %13 = arith.addf %10, %12 : vector<16x128xf32>
    %c0_10 = arith.constant 0 : index
    %c0_11 = arith.constant 0 : index
    %14 = vector.load %arg6[%c0_10, %c0_11] : memref<16x128xf32, #tpu.memory_space<vmem>>, vector<16x128xf32>
    tpu.vector_store %arg6[%c0_10, %c0_11], %13 {strides = array<i32>} : memref<16x128xf32, #tpu.memory_space<vmem>>, vector<16x128xf32>,
    return
  }
  func.func @transform_0(%arg0: i32) -> (i32, i32) {
    %c0_i32 = arith.constant 0 : i32
    %c0_i32_0 = arith.constant 0 : i32
    return %arg0, %c0_i32 : i32, i32
  }
  func.func @transform_1(%arg0: i32) -> (i32, i32) {
    %c0_i32 = arith.constant 0 : i32
    %c0_i32_0 = arith.constant 0 : i32
    %c0_i32_1 = arith.constant 0 : i32
    return %c0_i32, %c0_i32_0 : i32, i32
  }
  func.func @transform_2(%arg0: i32) -> (i32, i32) {
    %c0_i32 = arith.constant 0 : i32
    %c0_i32_0 = arith.constant 0 : i32
    %c0_i32_1 = arith.constant 0 : i32
    return %c0_i32, %c0_i32_0 : i32, i32
  }
  func.func @transform_3(%arg0: i32) -> (i32, i32) {
    %c0_i32 = arith.constant 0 : i32
    %c0_i32_0 = arith.constant 0 : i32
    %c0_i32_1 = arith.constant 0 : i32
    return %c0_i32, %c0_i32_0 : i32, i32
  }
  func.func @transform_4(%arg0: i32) -> (i32, i32) {
    %c0_i32 = arith.constant 0 : i32
    %c0_i32_0 = arith.constant 0 : i32
    %c0_i32_1 = arith.constant 0 : i32
    return %c0_i32, %c0_i32_0 : i32, i32
  }
  func.func @transform_5(%arg0: i32) -> (i32, i32) {
    %c0_i32 = arith.constant 0 : i32
    %c0_i32_0 = arith.constant 0 : i32
    return %arg0, %c0_i32 : i32, i32
  }
}

</mosaic_0001>

<llo_original>
// kernel: tpu_custom_call.1
$region0: #{tpu_custom_call.1}
  #allocation0 [shape = 'u32[]', space=smem, size = 0x4, offset = 0x4, fixed_abs, tag = 'smem constant byte address 0x4 - core index']
  #allocation1 [shape = 'u32[144,128]{1,0:T(1,128)}', space=vmem, size = 0x12000, scoped, tag = 'internal scratch']
  %s0 = inlined_call_operand.hbm [shape: f32[32,128], index: 0, kind: input, shape index: {}]
  %s1 = inlined_call_operand.hbm [shape: bf16[128,128], index: 1, kind: input, shape index: {}]
  %s2 = inlined_call_operand.vmem [shape: f32[1,128], index: 2, kind: input, shape index: {}]
  %s3 = inlined_call_operand.hbm [shape: bf16[128,128], index: 3, kind: input, shape index: {}]
  %s4 = inlined_call_operand.vmem [shape: f32[1,128], index: 4, kind: input, shape index: {}]
  %s5 = inlined_call_operand.hbm [shape: f32[32,128], index: 5, kind: output, shape index: {}]
  %s6 = sld [smem:[#allocation0]]
  $region65: #{tpu_custom_call.1} parent=0
    _
  %s8 = ssub.s32 1, %s6
  %s9 = scalar_select 0, %s8, %s6
  $region1: #{tpu_custom_call.1} parent=0
    #allocation2 [shape = 'u8[16384]{0}', space=vmem, size = 0x4000, scoped, tag = 'input window, operand 0']
    #allocation3 [shape = 's32[2]{0}', space=sflag, size = 0x8, scoped, tag = 'scoped memory for tpu_custom_call.1']
    #allocation4 [shape = 's32[2]{0}', space=sflag, size = 0x8, scoped, tag = 'scoped memory for tpu_custom_call.1']
    #allocation5 [shape = 'u8[32768]{0}', space=vmem, size = 0x8000, scoped, tag = 'input window, operand 1, single buffered']
    #allocation6 [shape = 's32[1]{0}', space=sflag, size = 0x4, scoped, tag = 'scoped memory for tpu_custom_call.1']
    #allocation7 [shape = 'u8[32768]{0}', space=vmem, size = 0x8000, scoped, tag = 'input window, operand 3, single buffered']
    #allocation8 [shape = 'u8[16384]{0}', space=vmem, size = 0x4000, scoped, tag = 'output window, operand 0']
    %10 = vsyncpa [#allocation3], 0
    %s11 = scalar_lea.sflag [#allocation3], 1
    %12 = vsyncpa %s11, 0
    %13 = vsyncpa [#allocation6], 0
    %14 = vsyncpa [#allocation4], 0
    %s15 = scalar_lea.sflag [#allocation4], 1
    %16 = vsyncpa %s15, 0
    loop: start=0, step=1, limit=4
    $region2: #{tpu_custom_call.1} parent=1 // loop_pre_header
      _
    $region3: #{tpu_custom_call.1} parent=1 // loop_header
      %s18 = sphi 0, %s22
      %p19 = scmp.ge.s32.totalorder %s18, 4
      %s28 = sphi 0, %s30
      %s31 = sphi 0, %s28
      %s32 = sphi 0, %s31
      %s48 = sphi 0, %s32
      %s52 = sphi 0, %s52
      %s54 = sphi 0, %s52
      %s55 = sphi 0, %s54
      %s69 = sphi 0, %s55
      %s73 = sphi 0, %s73
      %s75 = sphi 0, %s73
      %s76 = sphi 0, %s75
      %s90 = sphi 0, %s76
      %s94 = sphi 0, %s94
      %s96 = sphi 0, %s94
      %s97 = sphi 0, %s96
      %s111 = sphi 0, %s97
      %s115 = sphi 0, %s115
      %s117 = sphi 0, %s115
      %s118 = sphi 0, %s117
      %s132 = sphi 0, %s118
      %s138 = sphi 0, %s140
      %s141 = sphi 0, %s138
      %s142 = sphi 0, %s141
      %s158 = sphi 0, %s142
    $region4: #{tpu_custom_call.1} parent=1 // loop_header_branch
      %21 = sbr.rel (%p19) target = $region8
    $region5: #{tpu_custom_call.1} parent=1 // loop_body
      %s23 = ssub.s32 %s18, 1
      %s24 = ssub.s32 %s18, 2
      %s25 = sadd.s32 %s18, 1
      %s26 = ssub.s32 %s18, %s25
      %p27 = scmp.eq.s32.totalorder %s26, 0
      %s29 = sadd.s32 %s28, 1
      %s30 = scalar_select %p27, %s28, %s29
      %p33 = pneg %p27
      %p34 = scmp.eq.s32.totalorder %s18, 1
      %p35 = por %p33, %p34
      %p36 = scmp.ne.s32.totalorder %s28, %s31
      %p37 = scmp.eq.s32.totalorder %s18, 0
      %p38 = por %p36, %p37
      %p39 = scmp.ne.s32.totalorder %s28, %s31
      %p40 = scmp.eq.s32.totalorder %s23, 1
      %p41 = por %p39, %p40
      %p42 = scmp.ne.s32.totalorder %s31, %s32
      %p43 = scmp.eq.s32.totalorder %s23, 0
      %p44 = por %p42, %p43
      %p45 = scmp.ne.s32.totalorder %s31, %s32
      %p46 = scmp.eq.s32.totalorder %s24, 1
      %p47 = por %p45, %p46
      %p49 = scmp.ne.s32.totalorder %s32, %s48
      %p50 = scmp.eq.s32.totalorder %s24, 0
      %p51 = por %p49, %p50
      %s53 = sadd.s32 %s52, 1
      %p56 = scmp.eq.s32.totalorder %s18, 1
      %p57 = scmp.ne.s32.totalorder %s52, %s54
      %p58 = scmp.eq.s32.totalorder %s18, 0
      %p59 = por %p57, %p58
      %p60 = scmp.ne.s32.totalorder %s52, %s54
      %p61 = scmp.eq.s32.totalorder %s23, 1
      %p62 = por %p60, %p61
      %p63 = scmp.ne.s32.totalorder %s54, %s55
      %p64 = scmp.eq.s32.totalorder %s23, 0
      %p65 = por %p63, %p64
      %p66 = scmp.ne.s32.totalorder %s54, %s55
      %p67 = scmp.eq.s32.totalorder %s24, 1
      %p68 = por %p66, %p67
      %p70 = scmp.ne.s32.totalorder %s55, %s69
      %p71 = scmp.eq.s32.totalorder %s24, 0
      %p72 = por %p70, %p71
      %s74 = sadd.s32 %s73, 1
      %p77 = scmp.eq.s32.totalorder %s18, 1
      %p78 = scmp.ne.s32.totalorder %s73, %s75
      %p79 = scmp.eq.s32.totalorder %s18, 0
      %p80 = por %p78, %p79
      %p81 = scmp.ne.s32.totalorder %s73, %s75
      %p82 = scmp.eq.s32.totalorder %s23, 1
      %p83 = por %p81, %p82
      %p84 = scmp.ne.s32.totalorder %s75, %s76
      %p85 = scmp.eq.s32.totalorder %s23, 0
      %p86 = por %p84, %p85
      %p87 = scmp.ne.s32.totalorder %s75, %s76
      %p88 = scmp.eq.s32.totalorder %s24, 1
      %p89 = por %p87, %p88
      %p91 = scmp.ne.s32.totalorder %s76, %s90
      %p92 = scmp.eq.s32.totalorder %s24, 0
      %p93 = por %p91, %p92
      %s95 = sadd.s32 %s94, 1
      %p98 = scmp.eq.s32.totalorder %s18, 1
      %p99 = scmp.ne.s32.totalorder %s94, %s96
      %p100 = scmp.eq.s32.totalorder %s18, 0
      %p101 = por %p99, %p100
      %p102 = scmp.ne.s32.totalorder %s94, %s96
      %p103 = scmp.eq.s32.totalorder %s23, 1
      %p104 = por %p102, %p103
      %p105 = scmp.ne.s32.totalorder %s96, %s97
      %p106 = scmp.eq.s32.totalorder %s23, 0
      %p107 = por %p105, %p106
      %p108 = scmp.ne.s32.totalorder %s96, %s97
      %p109 = scmp.eq.s32.totalorder %s24, 1
      %p110 = por %p108, %p109
      %p112 = scmp.ne.s32.totalorder %s97, %s111
      %p113 = scmp.eq.s32.totalorder %s24, 0
      %p114 = por %p112, %p113
      %s116 = sadd.s32 %s115, 1
      %p119 = scmp.eq.s32.totalorder %s18, 1
      %p120 = scmp.ne.s32.totalorder %s115, %s117
      %p121 = scmp.eq.s32.totalorder %s18, 0
      %p122 = por %p120, %p121
      %p123 = scmp.ne.s32.totalorder %s115, %s117
      %p124 = scmp.eq.s32.totalorder %s23, 1
      %p125 = por %p123, %p124
      %p126 = scmp.ne.s32.totalorder %s117, %s118
      %p127 = scmp.eq.s32.totalorder %s23, 0
      %p128 = por %p126, %p127
      %p129 = scmp.ne.s32.totalorder %s117, %s118
      %p130 = scmp.eq.s32.totalorder %s24, 1
      %p131 = por %p129, %p130
      %p133 = scmp.ne.s32.totalorder %s118, %s132
      %p134 = scmp.eq.s32.totalorder %s24, 0
      %p135 = por %p133, %p134
      %s136 = ssub.s32 %s18, %s25
      %p137 = scmp.eq.s32.totalorder %s136, 0
      %s139 = sadd.s32 %s138, 1
      %s140 = scalar_select %p137, %s138, %s139
      %p143 = pneg %p137
      %p144 = scmp.eq.s32.totalorder %s18, 1
      %p145 = por %p143, %p144
      %p146 = scmp.ne.s32.totalorder %s138, %s141
      %p147 = scmp.eq.s32.totalorder %s18, 0
      %p148 = por %p146, %p147
      %p149 = scmp.ne.s32.totalorder %s138, %s141
      %p150 = scmp.eq.s32.totalorder %s23, 1
      %p151 = por %p149, %p150
      %p152 = scmp.ne.s32.totalorder %s141, %s142
      %p153 = scmp.eq.s32.totalorder %s23, 0
      %p154 = por %p152, %p153
      %p155 = scmp.ne.s32.totalorder %s141, %s142
      %p156 = scmp.eq.s32.totalorder %s24, 1
      %p157 = por %p155, %p156
      %p159 = scmp.ne.s32.totalorder %s142, %s158
      %p160 = scmp.eq.s32.totalorder %s24, 0
      %p161 = por %p159, %p160
      %p162 = scmp.le.s32.totalorder 1, %s18
      %p163 = scmp.lt.s32.totalorder %s18, 3
      %p164 = pnand %p162, %p163
      %p165 = pneg %p164
      // Predicated region
      $region9: #{tpu_custom_call.1} parent=5 // pred_check
        _
      $region10: #{tpu_custom_call.1} parent=5 // pred_check_branch
        %167 = sbr.rel (%p164) target = $region12
      $region11: #{tpu_custom_call.1} parent=5 // pred_region
        %s168 = ssub.s32 %s18, 1
        // Predicated region
        $region13: #{tpu_custom_call.1} parent=11 // pred_check
          %p169 = pneg %p65
        $region14: #{tpu_custom_call.1} parent=11 // pred_check_branch
          %171 = sbr.rel (%p169) target = $region16
        $region15: #{tpu_custom_call.1} parent=11 // pred_region
          %s173 = ssub.s32 1024, 1024
          %174 = vsyncadd [#allocation6], %s173
          %s175 = sshll.u32 [#allocation5], 4
          %s176 = int_to_ptr.vmem [resolvable:$true] %s175
          %181 = dma.hbm_to_vmem [thread:$0]  %s1, 1024, %s176, [#allocation6], 64, 64, 4
        $region16: #{tpu_custom_call.1} parent=11 // pred_fallthru
          _
        // Predicated region
        $region17: #{tpu_custom_call.1} parent=11 // pred_check
          %p182 = pneg %p86
        $region18: #{tpu_custom_call.1} parent=11 // pred_check_branch
          %184 = sbr.rel (%p182) target = $region20
        $region19: #{tpu_custom_call.1} parent=11 // pred_region
          _
        $region20: #{tpu_custom_call.1} parent=11 // pred_fallthru
          _
        // Predicated region
        $region21: #{tpu_custom_call.1} parent=11 // pred_check
          %p185 = pneg %p107
        $region22: #{tpu_custom_call.1} parent=11 // pred_check_branch
          %187 = sbr.rel (%p185) target = $region24
        $region23: #{tpu_custom_call.1} parent=11 // pred_region
          %s189 = ssub.s32 1024, 1024
          %190 = vsyncadd [#allocation6], %s189
          %s191 = sshll.u32 [#allocation7], 4
          %s192 = int_to_ptr.vmem [resolvable:$true] %s191
          %197 = dma.hbm_to_vmem [thread:$0]  %s3, 1024, %s192, [#allocation6], 64, 64, 4
        $region24: #{tpu_custom_call.1} parent=11 // pred_fallthru
          _
        // Predicated region
        $region25: #{tpu_custom_call.1} parent=11 // pred_check
          %p198 = pneg %p128
        $region26: #{tpu_custom_call.1} parent=11 // pred_check_branch
          %200 = sbr.rel (%p198) target = $region28
        $region27: #{tpu_custom_call.1} parent=11 // pred_region
          _
        $region28: #{tpu_custom_call.1} parent=11 // pred_fallthru
          _
      $region12: #{tpu_custom_call.1} parent=5 // pred_fallthru
        _
      %p201 = scmp.lt.s32.totalorder %s18, 2
      // Predicated region
      $region29: #{tpu_custom_call.1} parent=5 // pred_check
        %p202 = pneg %p201
      $region30: #{tpu_custom_call.1} parent=5 // pred_check_branch
        %204 = sbr.rel (%p202) target = $region32
      $region31: #{tpu_custom_call.1} parent=5 // pred_region
        // Predicated region
        $region33: #{tpu_custom_call.1} parent=31 // pred_check
          %p205 = pneg %p38
        $region34: #{tpu_custom_call.1} parent=31 // pred_check_branch
          %207 = sbr.rel (%p205) target = $region36
        $region35: #{tpu_custom_call.1} parent=31 // pred_region
          %s208 = sand.u32 %s28, 1
          %s209 = scalar_lea.sflag [#allocation3], %s208
          %s210 = sand.u32 %s28, 1
          %s211 = smul.addr %s210, 16
          %s212 = scalar_lea.vmem [#allocation2], %s211
          %s213 = smul.u32 2, %s18
          %s215 = ssub.s32 256, 256
          %216 = vsyncadd %s209, %s215
          %s217 = smul.addr %s213, 128
          %s218 = scalar_lea.hbm %s0, %s217
          %s219 = sshll.u32 %s212, 4
          %s220 = int_to_ptr.vmem [resolvable:$true] %s219
          %225 = dma.hbm_to_vmem [thread:$0]  %s218, 256, %s220, %s209, 128, 128, 8
        $region36: #{tpu_custom_call.1} parent=31 // pred_fallthru
          _
      $region32: #{tpu_custom_call.1} parent=5 // pred_fallthru
        _
      %p226 = scmp.le.s32.totalorder 1, %s18
      %p227 = scmp.lt.s32.totalorder %s18, 3
      %p228 = pnand %p226, %p227
      %p229 = pneg %p228
      // Predicated region
      $region37: #{tpu_custom_call.1} parent=5 // pred_check
        _
      $region38: #{tpu_custom_call.1} parent=5 // pred_check_branch
        %231 = sbr.rel (%p228) target = $region40
      $region39: #{tpu_custom_call.1} parent=5 // pred_region
        %s232 = ssub.s32 %s18, 1
        %s233 = sand.u32 %s31, 1
        %s234 = scalar_lea.sflag [#allocation3], %s233
        %s235 = sand.u32 %s31, 1
        %s236 = smul.addr %s235, 16
        %s237 = scalar_lea.vmem [#allocation2], %s236
        // Predicated region
        $region41: #{tpu_custom_call.1} parent=39 // pred_check
          %p238 = pneg %p44
        $region42: #{tpu_custom_call.1} parent=39 // pred_check_branch
          %240 = sbr.rel (%p238) target = $region44
        $region43: #{tpu_custom_call.1} parent=39 // pred_region
          %241 = dma.done %s234, 256
        $region44: #{tpu_custom_call.1} parent=39 // pred_fallthru
          _
        // Predicated region
        $region45: #{tpu_custom_call.1} parent=39 // pred_check
          %p242 = pneg %p65
        $region46: #{tpu_custom_call.1} parent=39 // pred_check_branch
          %244 = sbr.rel (%p242) target = $region48
        $region47: #{tpu_custom_call.1} parent=39 // pred_region
          %245 = dma.done [#allocation6], 1024
        $region48: #{tpu_custom_call.1} parent=39 // pred_fallthru
          _
        // Predicated region
        $region49: #{tpu_custom_call.1} parent=39 // pred_check
          %p246 = pneg %p107
        $region50: #{tpu_custom_call.1} parent=39 // pred_check_branch
          %248 = sbr.rel (%p246) target = $region52
        $region51: #{tpu_custom_call.1} parent=39 // pred_region
          %249 = dma.done [#allocation6], 1024
        $region52: #{tpu_custom_call.1} parent=39 // pred_fallthru
          _
        %s250 = sand.u32 %s31, 1
        %s251 = scalar_lea.sflag [#allocation3], %s250
        %s252 = sand.u32 %s31, 1
        %s253 = smul.addr %s252, 16
        %s254 = scalar_lea.vmem [#allocation2], %s253
        %p255 = pneg %p44
        %p256 = pneg %p41
        %p257 = pneg %p65
        %p258 = pneg %p62
        %p259 = pneg %p86
        %p260 = pneg %p83
        %p261 = pneg %p107
        %p262 = pneg %p104
        %p263 = pneg %p128
        %p264 = pneg %p125
        %p265 = pneg %p154
        %p266 = pneg %p151
        %s267 = sand.u32 %s141, 1
        %s268 = scalar_lea.sflag [#allocation4], %s267
        %s269 = sand.u32 %s141, 1
        %s270 = smul.addr %s269, 16
        %s271 = scalar_lea.vmem [#allocation8], %s270
        %s272 = smul.u32 2, %s23
        %s273 = smul.u32 2, %s23
        %v275 = vld [vmem:[%s237] sm:$0xff]
        %v276 = vld [vmem:[%s237 + $0x8] sm:$0xff]
        %v277 = vpack.c.bf16 %v276, %v275
        %v278 = vld [vmem:[#allocation5] sm:$0xf]
        %v279 = vld [vmem:[#allocation5 + $0x4] sm:$0xf]
        %v280 = vld [vmem:[#allocation5 + $0x8] sm:$0xf]
        %v281 = vld [vmem:[#allocation5 + $0xc] sm:$0xf]
        %v282 = vld [vmem:[#allocation5 + $0x10] sm:$0xf]
        %v283 = vld [vmem:[#allocation5 + $0x14] sm:$0xf]
        %v284 = vld [vmem:[#allocation5 + $0x18] sm:$0xf]
        %v285 = vld [vmem:[#allocation5 + $0x1c] sm:$0xf]
        %v286 = vld [vmem:[#allocation5 + $0x20] sm:$0xf]
        %v287 = vld [vmem:[#allocation5 + $0x24] sm:$0xf]
        %v288 = vld [vmem:[#allocation5 + $0x28] sm:$0xf]
        %v289 = vld [vmem:[#allocation5 + $0x2c] sm:$0xf]
        %v290 = vld [vmem:[#allocation5 + $0x30] sm:$0xf]
        %v291 = vld [vmem:[#allocation5 + $0x34] sm:$0xf]
        %v292 = vld [vmem:[#allocation5 + $0x38] sm:$0xf]
        %v293 = vld [vmem:[#allocation5 + $0x3c] sm:$0xf]
        %v294 = vld [vmem:[%s2] sm:$0x1]
        %v296 = vlaneseq
        %v297 = vshrl.u32 %v296, 7
        %v298 = vsub.s32 0, %v297
        %v299 = vrot.slane %v294, %v298
        %v317 = vunpack.c.l.b16 %v278
        %v318 = vunpack.c.l.b16 %v279
        %v319 = vunpack.c.l.b16 %v280
        %v320 = vunpack.c.l.b16 %v281
        %v321 = vunpack.c.l.b16 %v282
        %v322 = vunpack.c.l.b16 %v283
        %v323 = vunpack.c.l.b16 %v284
        %v324 = vunpack.c.l.b16 %v285
        %v325 = vunpack.c.l.b16 %v286
        %v326 = vunpack.c.l.b16 %v287
        %v327 = vunpack.c.l.b16 %v288
        %v328 = vunpack.c.l.b16 %v289
        %v329 = vunpack.c.l.b16 %v290
        %v330 = vunpack.c.l.b16 %v291
        %v331 = vunpack.c.l.b16 %v292
        %v332 = vunpack.c.l.b16 %v293
        %v333 = vpack.c.b16 %v318, %v317
        %v334 = vpack.c.b16 %v320, %v319
        %v335 = vpack.c.b16 %v322, %v321
        %v336 = vpack.c.b16 %v324, %v323
        %v337 = vpack.c.b16 %v326, %v325
        %v338 = vpack.c.b16 %v328, %v327
        %v339 = vpack.c.b16 %v330, %v329
        %v340 = vpack.c.b16 %v332, %v331
        %349 = vmatprep.subr.bf16.mxu0 0
        %350 = vmatpush1.bf16.msra.mxu0 %v333
        %351 = vmatprep.subr.bf16.mxu0 0
        %352 = vmatpush1.bf16.msra.mxu0 %v334
        %353 = vmatprep.subr.bf16.mxu0 0
        %354 = vmatpush1.bf16.msra.mxu0 %v335
        %355 = vmatprep.subr.bf16.mxu0 0
        %356 = vmatpush1.bf16.msra.mxu0 %v336
        %357 = vmatprep.subr.bf16.mxu0 0
        %358 = vmatpush1.bf16.msra.mxu0 %v337
        %359 = vmatprep.subr.bf16.mxu0 0
        %360 = vmatpush1.bf16.msra.mxu0 %v338
        %361 = vmatprep.subr.bf16.mxu0 0
        %362 = vmatpush1.bf16.msra.mxu0 %v339
        %363 = vmatprep.subr.bf16.mxu0 0
        %364 = vmatpush1.bf16.msra.mxu0 %v340
        %365 = vmatprep.subr.bf16.mxu0 0
        %366 = vmatpush1.bf16.msra.mxu0 0
        %367 = vmatprep.subr.bf16.mxu0 0
        %368 = vmatpush1.bf16.msra.mxu0 0
        %369 = vmatprep.subr.bf16.mxu0 0
        %370 = vmatpush1.bf16.msra.mxu0 0
        %371 = vmatprep.subr.bf16.mxu0 0
        %372 = vmatpush1.bf16.msra.mxu0 0
        %373 = vmatprep.subr.bf16.mxu0 0
        %374 = vmatpush1.bf16.msra.mxu0 0
        %375 = vmatprep.subr.bf16.mxu0 0
        %376 = vmatpush1.bf16.msra.mxu0 0
        %377 = vmatprep.subr.bf16.mxu0 0
        %378 = vmatpush1.bf16.msra.mxu0 0
        %379 = vmatprep.subr.bf16.mxu0 0
        %380 = vmatpush1.bf16.msra.mxu0 0
        %381 = vmatprep.mubr.bf16.mxu0 0
        %382 = vmatmul.mubr.bf16.gmra.mrb[0].mxu0 %v277
        %v383 = vpop.f32.mrb[0].mxu0
        %v384 = vadd.f32 %v299, %v383
        %v385 = vpop.f32.mrb[0].mxu0
        %v386 = vpop.f32.mrb[0].mxu0
        %v387 = vadd.f32 %v299, %v386
        %v388 = vpop.f32.mrb[0].mxu0
        %389 = vdwg.mxu0
        %v390 = vtanh.pop %v384
        %v391 = vtanh.pop %v387
        %v392 = vpack.c.bf16 %v391, %v390
        %v393 = vld [vmem:[#allocation7] sm:$0xf]
        %v394 = vld [vmem:[#allocation7 + $0x4] sm:$0xf]
        %v395 = vld [vmem:[#allocation7 + $0x8] sm:$0xf]
        %v396 = vld [vmem:[#allocation7 + $0xc] sm:$0xf]
        %v397 = vld [vmem:[#allocation7 + $0x10] sm:$0xf]
        %v398 = vld [vmem:[#allocation7 + $0x14] sm:$0xf]
        %v399 = vld [vmem:[#allocation7 + $0x18] sm:$0xf]
        %v400 = vld [vmem:[#allocation7 + $0x1c] sm:$0xf]
        %v401 = vld [vmem:[#allocation7 + $0x20] sm:$0xf]
        %v402 = vld [vmem:[#allocation7 + $0x24] sm:$0xf]
        %v403 = vld [vmem:[#allocation7 + $0x28] sm:$0xf]
        %v404 = vld [vmem:[#allocation7 + $0x2c] sm:$0xf]
        %v405 = vld [vmem:[#allocation7 + $0x30] sm:$0xf]
        %v406 = vld [vmem:[#allocation7 + $0x34] sm:$0xf]
        %v407 = vld [vmem:[#allocation7 + $0x38] sm:$0xf]
        %v408 = vld [vmem:[#allocation7 + $0x3c] sm:$0xf]
        %v409 = vld [vmem:[%s4] sm:$0x1]
        %v411 = vlaneseq
        %v412 = vshrl.u32 %v411, 7
        %v413 = vsub.s32 0, %v412
        %v414 = vrot.slane %v409, %v413
        %v432 = vunpack.c.l.b16 %v393
        %v433 = vunpack.c.l.b16 %v394
        %v434 = vunpack.c.l.b16 %v395
        %v435 = vunpack.c.l.b16 %v396
        %v436 = vunpack.c.l.b16 %v397
        %v437 = vunpack.c.l.b16 %v398
        %v438 = vunpack.c.l.b16 %v399
        %v439 = vunpack.c.l.b16 %v400
        %v440 = vunpack.c.l.b16 %v401
        %v441 = vunpack.c.l.b16 %v402
        %v442 = vunpack.c.l.b16 %v403
        %v443 = vunpack.c.l.b16 %v404
        %v444 = vunpack.c.l.b16 %v405
        %v445 = vunpack.c.l.b16 %v406
        %v446 = vunpack.c.l.b16 %v407
        %v447 = vunpack.c.l.b16 %v408
        %v448 = vpack.c.b16 %v433, %v432
        %v449 = vpack.c.b16 %v435, %v434
        %v450 = vpack.c.b16 %v437, %v436
        %v451 = vpack.c.b16 %v439, %v438
        %v452 = vpack.c.b16 %v441, %v440
        %v453 = vpack.c.b16 %v443, %v442
        %v454 = vpack.c.b16 %v445, %v444
        %v455 = vpack.c.b16 %v447, %v446
        %464 = vmatprep.subr.bf16.mxu0 0
        %465 = vmatpush1.bf16.msra.mxu0 %v448
        %466 = vmatprep.subr.bf16.mxu0 0
        %467 = vmatpush1.bf16.msra.mxu0 %v449
        %468 = vmatprep.subr.bf16.mxu0 0
        %469 = vmatpush1.bf16.msra.mxu0 %v450
        %470 = vmatprep.subr.bf16.mxu0 0
        %471 = vmatpush1.bf16.msra.mxu0 %v451
        %472 = vmatprep.subr.bf16.mxu0 0
        %473 = vmatpush1.bf16.msra.mxu0 %v452
        %474 = vmatprep.subr.bf16.mxu0 0
        %475 = vmatpush1.bf16.msra.mxu0 %v453
        %476 = vmatprep.subr.bf16.mxu0 0
        %477 = vmatpush1.bf16.msra.mxu0 %v454
        %478 = vmatprep.subr.bf16.mxu0 0
        %479 = vmatpush1.bf16.msra.mxu0 %v455
        %480 = vmatprep.subr.bf16.mxu0 0
        %481 = vmatpush1.bf16.msra.mxu0 0
        %482 = vmatprep.subr.bf16.mxu0 0
        %483 = vmatpush1.bf16.msra.mxu0 0
        %484 = vmatprep.subr.bf16.mxu0 0
        %485 = vmatpush1.bf16.msra.mxu0 0
        %486 = vmatprep.subr.bf16.mxu0 0
        %487 = vmatpush1.bf16.msra.mxu0 0
        %488 = vmatprep.subr.bf16.mxu0 0
        %489 = vmatpush1.bf16.msra.mxu0 0
        %490 = vmatprep.subr.bf16.mxu0 0
        %491 = vmatpush1.bf16.msra.mxu0 0
        %492 = vmatprep.subr.bf16.mxu0 0
        %493 = vmatpush1.bf16.msra.mxu0 0
        %494 = vmatprep.subr.bf16.mxu0 0
        %495 = vmatpush1.bf16.msra.mxu0 0
        %496 = vmatprep.mubr.bf16.mxu0 0
        %497 = vmatmul.mubr.bf16.gmra.mrb[0].mxu0 %v392
        %v498 = vpop.f32.mrb[0].mxu0
        %v499 = vadd.f32 %v414, %v498
        %v500 = vpop.f32.mrb[0].mxu0
        %v501 = vpop.f32.mrb[0].mxu0
        %v502 = vadd.f32 %v414, %v501
        %v503 = vpop.f32.mrb[0].mxu0
        %504 = vdwg.mxu0
        %505 = vst [vmem:[%s271] sm:$0xff] %v499
        %506 = vst [vmem:[%s271 + $0x8] sm:$0xff] %v502
        %s507 = sand.u32 %s141, 1
        %s508 = scalar_lea.sflag [#allocation4], %s507
        %s509 = sand.u32 %s141, 1
        %s510 = smul.addr %s509, 16
        %s511 = scalar_lea.vmem [#allocation8], %s510
        // Predicated region
        $region53: #{tpu_custom_call.1} parent=39 // pred_check
          %p512 = pneg %p151
        $region54: #{tpu_custom_call.1} parent=39 // pred_check_branch
          %514 = sbr.rel (%p512) target = $region56
        $region55: #{tpu_custom_call.1} parent=39 // pred_region
          %s515 = smul.u32 2, %s23
          %s517 = ssub.s32 256, 256
          %518 = vsyncadd %s508, %s517
          %s519 = smul.addr %s515, 128
          %s520 = scalar_lea.hbm %s5, %s519
          %s521 = sshll.u32 %s511, 4
          %s522 = int_to_ptr.vmem [resolvable:$true] %s521
          %527 = dma.vmem_to_hbm [thread:$0]  %s522, 256, %s520, %s508, 128, 128, 8
        $region56: #{tpu_custom_call.1} parent=39 // pred_fallthru
          _
      $region40: #{tpu_custom_call.1} parent=5 // pred_fallthru
        _
      %p528 = scmp.le.s32.totalorder 2, %s18
      // Predicated region
      $region57: #{tpu_custom_call.1} parent=5 // pred_check
        %p529 = pneg %p528
      $region58: #{tpu_custom_call.1} parent=5 // pred_check_branch
        %531 = sbr.rel (%p529) target = $region60
      $region59: #{tpu_custom_call.1} parent=5 // pred_region
        %s532 = ssub.s32 %s18, 2
        // Predicated region
        $region61: #{tpu_custom_call.1} parent=59 // pred_check
          %p533 = pneg %p157
        $region62: #{tpu_custom_call.1} parent=59 // pred_check_branch
          %535 = sbr.rel (%p533) target = $region64
        $region63: #{tpu_custom_call.1} parent=59 // pred_region
          %s536 = sand.u32 %s142, 1
          %s537 = scalar_lea.sflag [#allocation4], %s536
          %s538 = sand.u32 %s142, 1
          %s539 = smul.addr %s538, 16
          %s540 = scalar_lea.vmem [#allocation8], %s539
          %541 = dma.done %s537, 256
        $region64: #{tpu_custom_call.1} parent=59 // pred_fallthru
          _
      $region60: #{tpu_custom_call.1} parent=5 // pred_fallthru
        _
    $region6: #{tpu_custom_call.1} parent=1 // loop_footer
      %s22 = sadd.s32 1, %s18
    $region7: #{tpu_custom_call.1} parent=1 // loop_footer_branch
      %17 = sbr.rel target = $region3
    $region8: #{tpu_custom_call.1} parent=1 // loop_exit
      _
    %542 = vsyncpa [#allocation3], 1
    %s543 = scalar_lea.sflag [#allocation3], 1
    %544 = vsyncpa %s543, 1
    %545 = vsyncpa [#allocation6], 1
    %546 = vsyncpa [#allocation4], 1
    %s547 = scalar_lea.sflag [#allocation4], 1
    %548 = vsyncpa %s547, 1

</llo_original>
